<compile_context>
chip_gen: v5e
topology: v5e:2x2
jax: 0.10.0
libtpu: 0.0.40
codegen_flags: <defaults>
</compile_context>

<pallas_src>
import functools

import jax
import jax.numpy as jnp
from jax.experimental import pallas as pl
from jax.experimental.pallas import tpu as pltpu

_LANE = 128
_SUBLANE = 8


def decision_node_kernel(x_ref, w_ref, b_ref, o_ref):
    # Cast the freshly loaded x tile to bf16 on the VPU (free slot); MXU accumulates in f32.
    x = x_ref[...].astype(jnp.bfloat16)
    z = jnp.dot(x, w_ref[...], preferred_element_type=jnp.float32)
    z = z + b_ref[...]                       # (1, D_out) f32 bias broadcasts over batch rows
    # sigmoid(z) = 0.5 * tanh(z / 2) + 0.5  -> one EUP op (vs exp + reciprocal), f32 epilogue.
    o_ref[...] = (0.5 * jnp.tanh(0.5 * z) + 0.5).astype(o_ref.dtype)


def _round_down(x, m):
    return (x // m) * m


def _round_up(x, m):
    return ((x + m - 1) // m) * m


def _vmem_budget_bytes():
    """~3/4 of physical VMEM: ~48 MiB on v7x (64 MiB), ~96 MiB on v5e/v6e (128 MiB)."""
    try:
        cap = int(pltpu.get_tpu_info().vmem_capacity_bytes)
    except Exception:
        cap = 64 * 1024 * 1024          # assume the smallest generation (v7x) if unknown
    return (cap * 3) // 4


def _invariant_spec(block_shape, index_map):
    """Grid-invariant operand (constant index_map): single-buffer it when supported."""
    try:
        return pl.BlockSpec(block_shape, index_map,
                            pipeline_mode=pl.Buffered(buffer_count=1))
    except Exception:  # older jax without pipeline_mode -> default double buffering
        return pl.BlockSpec(block_shape, index_map)


def _pick_batch_tile(B, D_in, D_out, x_itemsize, out_itemsize, budget, tb_cap):
    if B <= _SUBLANE:
        return B                         # one block covering the whole (tiny) batch
    # Double-buffered x / out tiles must fit next to the resident (single-buffered) W, b.
    resident = D_in * D_out * 2 + D_out * 4              # bf16 W + f32 b
    per_row = 2 * (D_in * x_itemsize + D_out * out_itemsize)
    avail = budget - resident - (2 << 20)                # ~2 MiB headroom for compiler scratch
    tb = min(tb_cap, max(_SUBLANE, avail // per_row))
    # Prefer >= 2 batch tiles so ("parallel",) can split work across v7x's two TensorCores.
    tb = min(tb, _round_up(pl.cdiv(B, 2), _SUBLANE))
    return max(_SUBLANE, _round_down(tb, _SUBLANE))      # guarantee TB % 8 == 0


@functools.partial(jax.jit, static_argnames=("tb", "out_dtype"))
def decision_node_forward(x, w, b, *, tb=2048, out_dtype=jnp.bfloat16):
    """sigmoid(x @ w + b).  Output dtype defaults to bf16 (halves HBM writeback);
    upcast at the call site only if f32 is required downstream."""
    B, D_in = x.shape
    D_in_w, D_out = w.shape
    assert D_in == D_in_w, (D_in, D_in_w)

    w_bf16 = w.astype(jnp.bfloat16)                      # tiny, one-time; stays VMEM-resident
    b2d = jnp.reshape(b, (1, D_out)).astype(jnp.float32)

    budget = _vmem_budget_bytes()
    x_itemsize = jnp.dtype(x.dtype).itemsize
    out_itemsize = jnp.dtype(out_dtype).itemsize
    TB = _pick_batch_tile(B, D_in, D_out, x_itemsize, out_itemsize, budget, tb)
    grid = (pl.cdiv(B, TB),)                             # ragged last block is masked by Pallas

    cost = pl.CostEstimate(
        flops=2 * B * D_in * D_out,
        transcendentals=B * D_out,                       # one tanh per output element
        bytes_accessed=(B * D_in * x_itemsize            # x read once, source dtype
                        + D_in * D_out * 2               # W (bf16, resident)
                        + D_out * 4                      # b (f32)
                        + B * D_out * out_itemsize),     # output (bf16)
    )

    # TODO(synk): if D_in * D_out ever outgrows VMEM, add K/N grid axes (reduction last)
    # with a VMEM f32 accumulator and pl.when init/finalize (P1+P3 pattern).
    return pl.pallas_call(
        decision_node_kernel,
        out_shape=jax.ShapeDtypeStruct((B, D_out), out_dtype),
        grid_spec=pl.GridSpec(
            grid=grid,
            in_specs=[
                # x: tiled over batch, full D_in on lanes, read in its source dtype.
                pl.BlockSpec((TB, D_in), lambda i: (i, 0)),
                # W, b: same block every step -> VMEM-resident, single-buffered.
                _invariant_spec((D_in, D_out), lambda i: (0, 0)),
                _invariant_spec((1, D_out), lambda i: (0, 0)),
            ],
            out_specs=pl.BlockSpec((TB, D_out), lambda i: (i, 0)),
        ),
        compiler_params=pltpu.CompilerParams(
            dimension_semantics=("parallel",),           # independent batch tiles
            vmem_limit_bytes=int(budget),
        ),
        cost_estimate=cost,
    )(x, w_bf16, b2d)


if __name__ == "__main__":
    key = jax.random.PRNGKey(0)
    kx, kw, kb = jax.random.split(key, 3)

    B, D_in, D_out = 8, 32, 16
    x = jax.random.normal(kx, (B, D_in), dtype=jnp.float32)
    # Deterministic "model" (Linear) parameters — synthetic, no checkpoint load.
    w = jax.random.normal(kw, (D_in, D_out), dtype=jnp.float32) * 0.1
    b = jax.random.normal(kb, (D_out,), dtype=jnp.float32) * 0.1

    out = decision_node_forward(x, w, b)
    jax.block_until_ready(out)

    # Reference: same math as torch.sigmoid(model(x)) in f32.
    ref = jax.nn.sigmoid(x @ w + b)
    assert out.shape == (B, D_out), out.shape
    assert out.dtype == jnp.bfloat16, out.dtype
    # bf16 MXU inputs + bf16 output store -> small, bounded deviation from the f32 reference.
    err = float(jnp.max(jnp.abs(out.astype(jnp.float32) - ref)))
    assert err < 2e-2, err

    print("KERNEL_OK")
</pallas_src>

<mosaic_0001>
module attributes {stable_mosaic.version = 11 : i64} {
  func.func @decision_node_kernel(%arg0: i32, %arg1: memref<8x32xf32, #tpu.memory_space<vmem>>, %arg2: memref<32x16xbf16, #tpu.memory_space<vmem>>, %arg3: memref<1x16xf32, #tpu.memory_space<vmem>>, %arg4: memref<8x16xbf16, #tpu.memory_space<vmem>>) attributes {dimension_semantics = [#tpu.dimension_semantics<parallel>], iteration_bounds = array<i64: 1>, scalar_prefetch = 0 : i64, scratch_operands = 0 : i64, tpu.core_type = #tpu.core_type<tc>, window_params = [{transform_indices = @transform_0, window_bounds = array<i64: 8, 32>}, {pipeline_mode = #tpu.pipeline_mode<synchronous>, transform_indices = @transform_1, window_bounds = array<i64: 32, 16>}, {pipeline_mode = #tpu.pipeline_mode<synchronous>, transform_indices = @transform_2, window_bounds = array<i64: 1, 16>}, {transform_indices = @transform_3, window_bounds = array<i64: 8, 16>}]} {
    %c0 = arith.constant 0 : index
    %c0_0 = arith.constant 0 : index
    %0 = vector.load %arg1[%c0, %c0_0] : memref<8x32xf32, #tpu.memory_space<vmem>>, vector<8x32xf32>
    %1 = arith.truncf %0 : vector<8x32xf32> to vector<8x32xbf16>
    %c0_1 = arith.constant 0 : index
    %c0_2 = arith.constant 0 : index
    %2 = vector.load %arg2[%c0_1, %c0_2] : memref<32x16xbf16, #tpu.memory_space<vmem>>, vector<32x16xbf16>
    %cst = arith.constant dense<0.000000e+00> : vector<8x16xf32>
    %3 = tpu.matmul %1, %2, %cst {dimension_numbers = #tpu.dot_dimension_numbers<[1], [0], [0], [1], [0, 0, 1, 1], [], []>} : vector<8x32xbf16>, vector<32x16xbf16>, vector<8x16xf32> -> vector<8x16xf32>
    %c0_3 = arith.constant 0 : index
    %c0_4 = arith.constant 0 : index
    %4 = vector.load %arg3[%c0_3, %c0_4] : memref<1x16xf32, #tpu.memory_space<vmem>>, vector<1x16xf32>
    %5 = vector.broadcast %4 : vector<1x16xf32> to vector<8x16xf32>
    %6 = arith.addf %3, %5 : vector<8x16xf32>
    %cst_5 = arith.constant 5.000000e-01 : f32
    %7 = vector.broadcast %cst_5 : f32 to vector<8x16xf32>
    %8 = arith.mulf %7, %6 : vector<8x16xf32>
    %9 = math.tanh %8 : vector<8x16xf32>
    %cst_6 = arith.constant 5.000000e-01 : f32
    %10 = vector.broadcast %cst_6 : f32 to vector<8x16xf32>
    %11 = arith.mulf %10, %9 : vector<8x16xf32>
    %cst_7 = arith.constant 5.000000e-01 : f32
    %12 = vector.broadcast %cst_7 : f32 to vector<8x16xf32>
    %13 = arith.addf %11, %12 : vector<8x16xf32>
    %14 = arith.truncf %13 : vector<8x16xf32> to vector<8x16xbf16>
    %c0_8 = arith.constant 0 : index
    %c0_9 = arith.constant 0 : index
    %15 = vector.load %arg4[%c0_8, %c0_9] : memref<8x16xbf16, #tpu.memory_space<vmem>>, vector<8x16xbf16>
    tpu.vector_store %arg4[%c0_8, %c0_9], %14 {strides = array<i32>} : memref<8x16xbf16, #tpu.memory_space<vmem>>, vector<8x16xbf16>,
    return
  }
  func.func @transform_0(%arg0: i32) -> (i32, i32) {
    %c0_i32 = arith.constant 0 : i32
    %c0_i32_0 = arith.constant 0 : i32
    return %arg0, %c0_i32 : i32, i32
  }
  func.func @transform_1(%arg0: i32) -> (i32, i32) {
    %c0_i32 = arith.constant 0 : i32
    %c0_i32_0 = arith.constant 0 : i32
    %c0_i32_1 = arith.constant 0 : i32
    return %c0_i32, %c0_i32_0 : i32, i32
  }
  func.func @transform_2(%arg0: i32) -> (i32, i32) {
    %c0_i32 = arith.constant 0 : i32
    %c0_i32_0 = arith.constant 0 : i32
    %c0_i32_1 = arith.constant 0 : i32
    return %c0_i32, %c0_i32_0 : i32, i32
  }
  func.func @transform_3(%arg0: i32) -> (i32, i32) {
    %c0_i32 = arith.constant 0 : i32
    %c0_i32_0 = arith.constant 0 : i32
    return %arg0, %c0_i32 : i32, i32
  }
}

</mosaic_0001>

<llo_original>
// kernel: decision_node_forward.1
$region0: #{decision_node_forward.1}
  #allocation0 [shape = 'u32[]', space=smem, size = 0x4, offset = 0x4, fixed_abs, tag = 'smem constant byte address 0x4 - core index']
  #allocation1 [shape = 'u32[72,128]{1,0:T(1,128)}', space=vmem, size = 0x9000, scoped, tag = 'internal scratch']
  %s0 = inlined_call_operand.vmem [shape: f32[8,32], index: 0, kind: input, shape index: {}]
  %s1 = inlined_call_operand.vmem [shape: bf16[32,16], index: 1, kind: input, shape index: {}]
  %s2 = inlined_call_operand.vmem [shape: f32[1,16], index: 2, kind: input, shape index: {}]
  %s3 = inlined_call_operand.hbm [shape: bf16[8,16], index: 3, kind: output, shape index: {}]
  %s4 = sld [smem:[#allocation0]]
  $region22: #{decision_node_forward.1} parent=0
    _
  %s6 = ssub.s32 1, %s4
  %s7 = scalar_select 0, %s6, %s4
  $region1: #{decision_node_forward.1} parent=0
    #allocation2 [shape = 'u8[2048]{0}', space=vmem, size = 0x800, scoped, tag = 'output window, operand 0, single buffered']
    #allocation3 [shape = 's32[1]{0}', space=sflag, size = 0x4, scoped, tag = 'scoped memory for decision_node_forward.1']
    %8 = vsyncpa [#allocation3], 0
    // Predicated region
    $region2: #{decision_node_forward.1} parent=1 // pred_check
      _
    $region3: #{decision_node_forward.1} parent=1 // pred_check_branch
      %10 = sbr.rel (0) target = $region5
    $region4: #{decision_node_forward.1} parent=1 // pred_region
      _
    $region5: #{decision_node_forward.1} parent=1 // pred_fallthru
      _
    // Predicated region
    $region6: #{decision_node_forward.1} parent=1 // pred_check
      _
    $region7: #{decision_node_forward.1} parent=1 // pred_check_branch
      %12 = sbr.rel (0) target = $region9
    $region8: #{decision_node_forward.1} parent=1 // pred_region
      _
    $region9: #{decision_node_forward.1} parent=1 // pred_fallthru
      _
    // Predicated region
    $region10: #{decision_node_forward.1} parent=1 // pred_check
      _
    $region11: #{decision_node_forward.1} parent=1 // pred_check_branch
      %14 = sbr.rel (0) target = $region13
    $region12: #{decision_node_forward.1} parent=1 // pred_region
      _
    $region13: #{decision_node_forward.1} parent=1 // pred_fallthru
      _
    %v16 = vld [vmem:[%s0] sm:$0xff]
    %v17 = vpack.c.bf16 %v16, %v16
    %v18 = vld [vmem:[%s1] sm:$0xf]
    %v19 = vld [vmem:[%s1 + $0x4] sm:$0xf]
    %v20 = vld [vmem:[%s1 + $0x8] sm:$0xf]
    %v21 = vld [vmem:[%s1 + $0xc] sm:$0xf]
    %v22 = vld [vmem:[%s2] sm:$0x1]
    %v24 = vperm.slane %v22, 0
    %v30 = vunpack.c.l.b16 %v18
    %v31 = vunpack.c.l.b16 %v19
    %v32 = vunpack.c.l.b16 %v20
    %v33 = vunpack.c.l.b16 %v21
    %v34 = vpack.c.b16 %v31, %v30
    %v35 = vpack.c.b16 %v33, %v32
    %vm38 = vcmask 261120
    %v40 = vsel %vm38, %v17, 0
    %42 = vmatpush.bf16.msra.mxu0 0
    %43 = vmatpush.bf16.msra.mxu0 0
    %44 = vmatpush.bf16.msra.mxu0 0
    %45 = vmatpush.bf16.msra.mxu0 0
    %46 = vmatpush.bf16.msra.mxu0 0
    %47 = vmatpush.bf16.msra.mxu0 0
    %48 = vmatpush.bf16.msra.mxu0 %v35
    %49 = vmatpush.bf16.msra.mxu0 %v34
    %50 = vmatmul.bf16.gmra.mxu0 %v40
    %v51 = vpop.f32.mrf.mxu0
    %v52 = vadd.f32 %v24, %v51
    %v53 = vpop.f32.mrf.mxu0
    %54 = vdwg.mxu0
    %v55 = vmul.f32 %v52, 0.5
    %v56 = vtanh.pop %v55
    %v57 = vmul.f32 %v56, 0.5
    %v58 = vadd.f32 %v57, 0.5
    %v59 = vpack.c.bf16 %v58, %v58
    %vm60 = vcmask 125952
    %61 = vst.msk [vmem:[#allocation2] sm:$0xf] %vm60, %v59
    // Predicated region
    $region14: #{decision_node_forward.1} parent=1 // pred_check
      _
    $region15: #{decision_node_forward.1} parent=1 // pred_check_branch
      %63 = sbr.rel (0) target = $region17
    $region16: #{decision_node_forward.1} parent=1 // pred_region
      %65 = vsyncadd [#allocation3], 0
      %s67 = sshll.u32 [#allocation2], 4
      %s68 = int_to_ptr.vmem [resolvable:$true] %s67
      %s69 = sshll.u32 %s3, 4
      %s70 = int_to_ptr.hbm [resolvable:$true] %s69
      %72 = dma.vmem_to_hbm [thread:$0]  %s68, 64, %s70, [#allocation3]
    $region17: #{decision_node_forward.1} parent=1 // pred_fallthru
      _
    // Predicated region
    $region18: #{decision_node_forward.1} parent=1 // pred_check
      _
    $region19: #{decision_node_forward.1} parent=1 // pred_check_branch
      %74 = sbr.rel (0) target = $region21
    $region20: #{decision_node_forward.1} parent=1 // pred_region
      %76 = dma.done [#allocation3], 64
    $region21: #{decision_node_forward.1} parent=1 // pred_fallthru
      _
    %77 = vsyncpa [#allocation3], 1

</llo_original>
